<compile_context>
chip_gen: v7x
topology: tpu7x:2x2x1
jax: 0.10.0
libtpu: 0.0.40
codegen_flags: <defaults>
</compile_context>

<pallas_src>
import functools

import jax
import jax.numpy as jnp
import numpy as np
from jax.experimental import pallas as pl
from jax.experimental.pallas import tpu as pltpu


def _round_up(v, m):
    return ((v + m - 1) // m) * m


def _global_sa_kernel(fused_ref, w1_ref, b1_ref, w2_ref, b2_ref, w3_ref, b3_ref,
                      out_ref, *, num_graphs, batch_col, out_chunk):
    """One N-tile: 3-layer point-wise MLP (MXU) + running segment max."""
    step = pl.program_id(0)

    @pl.when(step == 0)
    def _init():
        # Output block is resident across the whole grid (constant index map);
        # it doubles as the running per-graph max.  0 is a valid max identity
        # because the MLP ends in ReLU (y >= 0).  NOTE: empty graphs pool to
        # 0, not -inf; this assumption breaks if the final ReLU is removed.
        out_ref[...] = jnp.zeros(out_ref.shape, dtype=out_ref.dtype)

    fused = fused_ref[...]                                   # [TN, Kin] f32
    # Recover int32 graph ids from the bit-cast last column (padding rows
    # carry the sentinel id == num_graphs, which matches no graph).
    b_ids = pltpu.bitcast(fused[:, batch_col:batch_col + 1], jnp.int32)  # [TN,1]

    # Layer 1 (f32; contraction width is tiny).  The batch-bit column hits a
    # zero weight row, so it contributes exactly 0.
    h = jnp.dot(fused, w1_ref[...], preferred_element_type=jnp.float32) + b1_ref[...]
    h = jnp.maximum(h, 0.0)

    # Layer 2: bf16 (or f32) MXU inputs, f32 accumulation, f32 bias/ReLU.
    h = jnp.dot(h.astype(w2_ref.dtype), w2_ref[...],
                preferred_element_type=jnp.float32) + b2_ref[...]
    h = jnp.maximum(h, 0.0)
    h = h.astype(w3_ref.dtype)

    # Layer 3 + segment max, chunked over 128-aligned output columns.
    bp, outp = out_ref.shape
    for c0 in range(0, outp, out_chunk):
        cw = min(out_chunk, outp - c0)
        yc = jnp.dot(h, w3_ref[:, c0:c0 + cw],
                     preferred_element_type=jnp.float32) + b3_ref[:, c0:c0 + cw]
        yc = jnp.maximum(yc, 0.0)                            # [TN, cw], >= 0

        # TODO(synk): convert to lax.fori_loop once num_graphs grows large.
        rows = [jnp.max(jnp.where(b_ids == g, yc, 0.0), axis=0, keepdims=True)
                for g in range(num_graphs)]
        if bp > num_graphs:
            rows.append(jnp.zeros((bp - num_graphs, cw), jnp.float32))
        contrib = jnp.concatenate(rows, axis=0)              # [Bp, cw]

        # One whole-block, lane/sublane-dense read-modify-write per chunk
        # (no per-graph masked single-row stores).
        out_ref[:, c0:c0 + cw] = jnp.maximum(out_ref[:, c0:c0 + cw], contrib)


def global_sa_module(x, pos, batch, params, num_graphs, *,
                     matmul_dtype=jnp.bfloat16, tile_n=512, out_chunk=512):
    """JAX wrapper reproducing GlobalSAModule.forward.

    Returns (pooled [B, OUT], pos_out zeros [B, 3], batch_out arange(B)).
    """
    N, C = x.shape
    w1, b1, w2, b2, w3, b3 = params
    H1, H2, OUT = w1.shape[1], w2.shape[1], w3.shape[1]
    assert w1.shape[0] == C + 3, "layer-1 weight must take concat([x, pos])"

    # Pad feature widths to 128 lanes (MXU-friendly tiles, unmasked stores).
    H1p, H2p, OUTp = (_round_up(d, 128) for d in (H1, H2, OUT))
    Kin = C + 3 + 1              # x | pos | bitcast(batch id)
    batch_col = C + 3

    def pad2(a, r, c):
        return jnp.pad(a, ((0, r - a.shape[0]), (0, c - a.shape[1])))

    # Layer-1 weight kept f32 (tiny); row under the batch-bit column is zero.
    w1f = pad2(w1, Kin, H1p).astype(jnp.float32)
    b1p = pad2(b1, 1, H1p).astype(jnp.float32)
    w2p = pad2(w2, H1p, H2p).astype(matmul_dtype)
    b2p = pad2(b2, 1, H2p).astype(jnp.float32)
    w3p = pad2(w3, H2p, OUTp).astype(matmul_dtype)
    b3p = pad2(b3, 1, OUTp).astype(jnp.float32)

    # Tile the point dimension; pad graph rows to a sublane multiple.
    TN = _round_up(min(tile_n, _round_up(N, 8)), 8)
    N_pad = _round_up(N, TN)
    Bp = _round_up(max(num_graphs, 1), 8)

    # Single fused streamed input: [N_pad, Kin] f32.
    # Padding rows: features 0, batch id = num_graphs (never matches a graph;
    # -1 would bit-cast to NaN, num_graphs is a harmless tiny bit pattern).
    batch_ids = jnp.full((N_pad,), num_graphs, dtype=jnp.int32)
    batch_ids = batch_ids.at[:N].set(batch.astype(jnp.int32))
    fused = jnp.zeros((N_pad, Kin), jnp.float32)
    fused = fused.at[:N, :C].set(x.astype(jnp.float32))
    fused = fused.at[:N, C:C + 3].set(pos.astype(jnp.float32))
    fused = fused.at[:, batch_col].set(
        jax.lax.bitcast_convert_type(batch_ids, jnp.float32))

    oc = min(_round_up(out_chunk, 128), OUTp)
    kernel = functools.partial(_global_sa_kernel, num_graphs=num_graphs,
                               batch_col=batch_col, out_chunk=oc)

    rows_map = lambda i: (i, 0)      # streamed per-tile input
    const_map = lambda i: (0, 0)     # resident weights / output accumulator
    n_steps = pl.cdiv(N_pad, TN)

    cost = pl.CostEstimate(
        flops=2 * N_pad * (Kin * H1p + H1p * H2p + H2p * OUTp),
        transcendentals=0,
        bytes_accessed=int(fused.size * 4 + w1f.size * 4 + b1p.size * 4
                           + w2p.size * w2p.dtype.itemsize + b2p.size * 4
                           + w3p.size * w3p.dtype.itemsize + b3p.size * 4
                           + Bp * OUTp * 4),
    )

    def _run(single_buffer_weights):
        if single_buffer_weights:
            wspec = lambda shape: pl.BlockSpec(shape, const_map,
                                               pipeline_mode=pl.Buffered(1))
        else:
            wspec = lambda shape: pl.BlockSpec(shape, const_map)
        out = pl.pallas_call(
            kernel,
            out_shape=jax.ShapeDtypeStruct((Bp, OUTp), jnp.float32),
            grid=(n_steps,),
            in_specs=[
                pl.BlockSpec((TN, Kin), rows_map),   # fused x | pos | batch-bits
                wspec((Kin, H1p)),                   # w1 (fused, f32)
                wspec((1, H1p)),                     # b1
                wspec((H1p, H2p)),                   # w2
                wspec((1, H2p)),                     # b2
                wspec((H2p, OUTp)),                  # w3
                wspec((1, OUTp)),                    # b3
            ],
            out_specs=pl.BlockSpec((Bp, OUTp), const_map),   # resident accumulator
            compiler_params=pltpu.CompilerParams(
                dimension_semantics=("arbitrary",),  # N axis is a reduction
                # 48 MiB scoped VMEM: above every gen's default (16/32 MiB),
                # below v7x's 64 MiB physical.  Re-derive if tile_n is raised
                # to 1024-2048 for v6e's 128 MiB.
                vmem_limit_bytes=48 * 1024 * 1024,
            ),
            cost_estimate=cost,
        )(fused, w1f, b1p, w2p, b2p, w3p, b3p)
        return jax.block_until_ready(out)

    try:
        pooled_pad = _run(True)
    except Exception:
        # pipeline_mode=pl.Buffered(1) not supported by this JAX build; fall
        # back to default (double) buffering -- weights still DMA'd once.
        pooled_pad = _run(False)

    pooled = pooled_pad[:num_graphs, :OUT]

    # Glue outputs (no compute): pos.new_zeros((B, 3)), torch.arange(B).
    pos_out = jnp.zeros((num_graphs, 3), dtype=pos.dtype)
    batch_out = jnp.arange(num_graphs, dtype=jnp.int32)
    return pooled, pos_out, batch_out


def _reference(x, pos, batch, params, num_graphs):
    """Plain-JAX reference for correctness checking."""
    w1, b1, w2, b2, w3, b3 = params
    xin = jnp.concatenate([x, pos], axis=1)
    h = jnp.maximum(xin @ w1 + b1, 0.0)
    h = jnp.maximum(h @ w2 + b2, 0.0)
    y = jnp.maximum(h @ w3 + b3, 0.0)
    rows = []
    for b in range(num_graphs):
        m = (batch == b)[:, None]
        rows.append(jnp.max(jnp.where(m, y, -jnp.inf), axis=0, keepdims=True))
    return jnp.concatenate(rows, axis=0)


if __name__ == "__main__":
    # Small deterministic problem: 2 graphs x 8 points each, 4 feature channels.
    N, C, B = 16, 4, 2
    H1, H2, OUT = 32, 32, 64
    IN = C + 3

    key = jax.random.PRNGKey(0)
    kx, kp, k1, k2, k3, k4, k5, k6 = jax.random.split(key, 8)

    x = jax.random.normal(kx, (N, C), dtype=jnp.float32)
    pos = jax.random.normal(kp, (N, 3), dtype=jnp.float32)
    batch = jnp.concatenate([jnp.zeros(N // 2, jnp.int32),
                             jnp.ones(N // 2, jnp.int32)])

    # Deterministic parameter init (synthetic weights, no checkpoint load).
    params = (
        jax.random.normal(k1, (IN, H1), jnp.float32) * 0.2,
        jax.random.normal(k2, (1, H1), jnp.float32) * 0.1,
        jax.random.normal(k3, (H1, H2), jnp.float32) * 0.2,
        jax.random.normal(k4, (1, H2), jnp.float32) * 0.1,
        jax.random.normal(k5, (H2, OUT), jnp.float32) * 0.2,
        jax.random.normal(k6, (1, OUT), jnp.float32) * 0.1,
    )

    ref = _reference(x, pos, batch, params, B)

    # Default path: bf16 MXU for layers 2/3, f32 accumulation -> loose check.
    pooled, pos_out, batch_out = global_sa_module(x, pos, batch, params, B)
    jax.block_until_ready((pooled, pos_out, batch_out))
    assert pooled.shape == (B, OUT)
    assert pos_out.shape == (B, 3)
    assert batch_out.shape == (B,)
    np.testing.assert_allclose(np.asarray(pooled), np.asarray(ref),
                               rtol=5e-2, atol=5e-2)

    # Full-f32 matmul path: exact check.
    pooled_f32, _, _ = global_sa_module(x, pos, batch, params, B,
                                        matmul_dtype=jnp.float32)
    jax.block_until_ready(pooled_f32)
    np.testing.assert_allclose(np.asarray(pooled_f32), np.asarray(ref),
                               rtol=1e-5, atol=1e-5)

    print("KERNEL_OK")
</pallas_src>

<mosaic_0001>
module attributes {stable_mosaic.version = 11 : i64} {
  func.func @_global_sa_kernel(%arg0: i32, %arg1: memref<16x8xf32, #tpu.memory_space<vmem>>, %arg2: memref<8x128xf32, #tpu.memory_space<vmem>>, %arg3: memref<1x128xf32, #tpu.memory_space<vmem>>, %arg4: memref<128x128xbf16, #tpu.memory_space<vmem>>, %arg5: memref<1x128xf32, #tpu.memory_space<vmem>>, %arg6: memref<128x128xbf16, #tpu.memory_space<vmem>>, %arg7: memref<1x128xf32, #tpu.memory_space<vmem>>, %arg8: memref<8x128xf32, #tpu.memory_space<vmem>>) attributes {dimension_semantics = [#tpu.dimension_semantics<arbitrary>], iteration_bounds = array<i64: 1>, scalar_prefetch = 0 : i64, scratch_operands = 0 : i64, tpu.core_type = #tpu.core_type<tc>, window_params = [{transform_indices = @transform_0, window_bounds = array<i64: 16, 8>}, {pipeline_mode = #tpu.pipeline_mode<synchronous>, transform_indices = @transform_1, window_bounds = array<i64: 8, 128>}, {pipeline_mode = #tpu.pipeline_mode<synchronous>, transform_indices = @transform_2, window_bounds = array<i64: 1, 128>}, {pipeline_mode = #tpu.pipeline_mode<synchronous>, transform_indices = @transform_3, window_bounds = array<i64: 128, 128>}, {pipeline_mode = #tpu.pipeline_mode<synchronous>, transform_indices = @transform_4, window_bounds = array<i64: 1, 128>}, {pipeline_mode = #tpu.pipeline_mode<synchronous>, transform_indices = @transform_5, window_bounds = array<i64: 128, 128>}, {pipeline_mode = #tpu.pipeline_mode<synchronous>, transform_indices = @transform_6, window_bounds = array<i64: 1, 128>}, {pipeline_mode = #tpu.pipeline_mode<synchronous>, transform_indices = @transform_7, window_bounds = array<i64: 8, 128>}]} {
    %c0_i32 = arith.constant 0 : i32
    %0 = arith.cmpi eq, %arg0, %c0_i32 : i32
    %1 = arith.extui %0 : i1 to i32
    %c0_i32_0 = arith.constant 0 : i32
    %2 = arith.cmpi ne, %1, %c0_i32_0 : i32
    scf.if %2 {
      %cst_29 = arith.constant 0.000000e+00 : f32
      %50 = vector.broadcast %cst_29 : f32 to vector<8x128xf32>
      %c0_30 = arith.constant 0 : index
      %c0_31 = arith.constant 0 : index
      %51 = vector.load %arg8[%c0_30, %c0_31] : memref<8x128xf32, #tpu.memory_space<vmem>>, vector<8x128xf32>
      tpu.vector_store %arg8[%c0_30, %c0_31], %50 {strides = array<i32>} : memref<8x128xf32, #tpu.memory_space<vmem>>, vector<8x128xf32>,
    } else {
    }
    %c0 = arith.constant 0 : index
    %c0_1 = arith.constant 0 : index
    %3 = vector.load %arg1[%c0, %c0_1] : memref<16x8xf32, #tpu.memory_space<vmem>>, vector<16x8xf32>
    %4 = vector.extract_strided_slice %3 {offsets = [0, 7], sizes = [16, 1], strides = [1, 1]} : vector<16x8xf32> to vector<16x1xf32>
    %5 = tpu.bitcast %4 : vector<16x1xf32> -> vector<16x1xi32>
    %c0_2 = arith.constant 0 : index
    %c0_3 = arith.constant 0 : index
    %6 = vector.load %arg2[%c0_2, %c0_3] : memref<8x128xf32, #tpu.memory_space<vmem>>, vector<8x128xf32>
    %cst = arith.constant dense<0.000000e+00> : vector<16x128xf32>
    %7 = tpu.matmul %3, %6, %cst {dimension_numbers = #tpu.dot_dimension_numbers<[1], [0], [0], [1], [0, 0, 1, 1], [], []>} : vector<16x8xf32>, vector<8x128xf32>, vector<16x128xf32> -> vector<16x128xf32>
    %c0_4 = arith.constant 0 : index
    %c0_5 = arith.constant 0 : index
    %8 = vector.load %arg3[%c0_4, %c0_5] : memref<1x128xf32, #tpu.memory_space<vmem>>, vector<1x128xf32>
    %9 = vector.broadcast %8 : vector<1x128xf32> to vector<16x128xf32>
    %10 = arith.addf %7, %9 : vector<16x128xf32>
    %cst_6 = arith.constant 0.000000e+00 : f32
    %11 = vector.broadcast %cst_6 : f32 to vector<16x128xf32>
    %12 = arith.maximumf %10, %11 : vector<16x128xf32>
    %13 = arith.truncf %12 : vector<16x128xf32> to vector<16x128xbf16>
    %c0_7 = arith.constant 0 : index
    %c0_8 = arith.constant 0 : index
    %14 = vector.load %arg4[%c0_7, %c0_8] : memref<128x128xbf16, #tpu.memory_space<vmem>>, vector<128x128xbf16>
    %cst_9 = arith.constant dense<0.000000e+00> : vector<16x128xf32>
    %15 = tpu.matmul %13, %14, %cst_9 {dimension_numbers = #tpu.dot_dimension_numbers<[1], [0], [0], [1], [0, 0, 1, 1], [], []>} : vector<16x128xbf16>, vector<128x128xbf16>, vector<16x128xf32> -> vector<16x128xf32>
    %c0_10 = arith.constant 0 : index
    %c0_11 = arith.constant 0 : index
    %16 = vector.load %arg5[%c0_10, %c0_11] : memref<1x128xf32, #tpu.memory_space<vmem>>, vector<1x128xf32>
    %17 = vector.broadcast %16 : vector<1x128xf32> to vector<16x128xf32>
    %18 = arith.addf %15, %17 : vector<16x128xf32>
    %cst_12 = arith.constant 0.000000e+00 : f32
    %19 = vector.broadcast %cst_12 : f32 to vector<16x128xf32>
    %20 = arith.maximumf %18, %19 : vector<16x128xf32>
    %21 = arith.truncf %20 : vector<16x128xf32> to vector<16x128xbf16>
    %c0_13 = arith.constant 0 : index
    %c0_14 = arith.constant 0 : index
    %22 = vector.load %arg6[%c0_13, %c0_14] : memref<128x128xbf16, #tpu.memory_space<vmem>>, vector<128x128xbf16>
    %cst_15 = arith.constant dense<0.000000e+00> : vector<16x128xf32>
    %23 = tpu.matmul %21, %22, %cst_15 {dimension_numbers = #tpu.dot_dimension_numbers<[1], [0], [0], [1], [0, 0, 1, 1], [], []>} : vector<16x128xbf16>, vector<128x128xbf16>, vector<16x128xf32> -> vector<16x128xf32>
    %c0_16 = arith.constant 0 : index
    %c0_17 = arith.constant 0 : index
    %24 = vector.load %arg7[%c0_16, %c0_17] : memref<1x128xf32, #tpu.memory_space<vmem>>, vector<1x128xf32>
    %25 = vector.broadcast %24 : vector<1x128xf32> to vector<16x128xf32>
    %26 = arith.addf %23, %25 : vector<16x128xf32>
    %cst_18 = arith.constant 0.000000e+00 : f32
    %27 = vector.broadcast %cst_18 : f32 to vector<16x128xf32>
    %28 = arith.maximumf %26, %27 : vector<16x128xf32>
    %c0_i32_19 = arith.constant 0 : i32
    %29 = vector.broadcast %c0_i32_19 : i32 to vector<16x1xi32>
    %30 = arith.cmpi eq, %5, %29 : vector<16x1xi32>
    %cst_20 = arith.constant 0.000000e+00 : f32
    %31 = vector.shape_cast %30 : vector<16x1xi1> to vector<16x1xi1>
    %32 = vector.broadcast %31 : vector<16x1xi1> to vector<16x128xi1>
    %33 = vector.broadcast %cst_20 : f32 to vector<16x128xf32>
    %34 = arith.select %32, %28, %33 : vector<16x128xi1>, vector<16x128xf32>
    %cst_21 = arith.constant dense<0xFF800000> : vector<128xf32>
    %35 = vector.multi_reduction <maximumf>, %34, %cst_21 [0] : vector<16x128xf32> to vector<128xf32>
    %36 = vector.shape_cast %35 : vector<128xf32> to vector<1x128xf32>
    %c1_i32 = arith.constant 1 : i32
    %37 = vector.broadcast %c1_i32 : i32 to vector<16x1xi32>
    %38 = arith.cmpi eq, %5, %37 : vector<16x1xi32>
    %cst_22 = arith.constant 0.000000e+00 : f32
    %39 = vector.shape_cast %38 : vector<16x1xi1> to vector<16x1xi1>
    %40 = vector.broadcast %39 : vector<16x1xi1> to vector<16x128xi1>
    %41 = vector.broadcast %cst_22 : f32 to vector<16x128xf32>
    %42 = arith.select %40, %28, %41 : vector<16x128xi1>, vector<16x128xf32>
    %cst_23 = arith.constant dense<0xFF800000> : vector<128xf32>
    %43 = vector.multi_reduction <maximumf>, %42, %cst_23 [0] : vector<16x128xf32> to vector<128xf32>
    %44 = vector.shape_cast %43 : vector<128xf32> to vector<1x128xf32>
    %cst_24 = arith.constant 0.000000e+00 : f32
    %45 = vector.broadcast %cst_24 : f32 to vector<6x128xf32>
    %46 = tpu.concatenate %36, %44, %45 in 0 : vector<1x128xf32>, vector<1x128xf32>, vector<6x128xf32> -> vector<8x128xf32>
    %c0_25 = arith.constant 0 : index
    %c0_26 = arith.constant 0 : index
    %47 = vector.load %arg8[%c0_25, %c0_26] : memref<8x128xf32, #tpu.memory_space<vmem>>, vector<8x128xf32>
    %48 = arith.maximumf %47, %46 : vector<8x128xf32>
    %c0_27 = arith.constant 0 : index
    %c0_28 = arith.constant 0 : index
    %49 = vector.load %arg8[%c0_27, %c0_28] : memref<8x128xf32, #tpu.memory_space<vmem>>, vector<8x128xf32>
    tpu.vector_store %arg8[%c0_27, %c0_28], %48 {strides = array<i32>} : memref<8x128xf32, #tpu.memory_space<vmem>>, vector<8x128xf32>,
    return
  }
  func.func @transform_0(%arg0: i32) -> (i32, i32) {
    %c0_i32 = arith.constant 0 : i32
    %c0_i32_0 = arith.constant 0 : i32
    return %arg0, %c0_i32 : i32, i32
  }
  func.func @transform_1(%arg0: i32) -> (i32, i32) {
    %c0_i32 = arith.constant 0 : i32
    %c0_i32_0 = arith.constant 0 : i32
    %c0_i32_1 = arith.constant 0 : i32
    return %c0_i32, %c0_i32_0 : i32, i32
  }
  func.func @transform_2(%arg0: i32) -> (i32, i32) {
    %c0_i32 = arith.constant 0 : i32
    %c0_i32_0 = arith.constant 0 : i32
    %c0_i32_1 = arith.constant 0 : i32
    return %c0_i32, %c0_i32_0 : i32, i32
  }
  func.func @transform_3(%arg0: i32) -> (i32, i32) {
    %c0_i32 = arith.constant 0 : i32
    %c0_i32_0 = arith.constant 0 : i32
    %c0_i32_1 = arith.constant 0 : i32
    return %c0_i32, %c0_i32_0 : i32, i32
  }
  func.func @transform_4(%arg0: i32) -> (i32, i32) {
    %c0_i32 = arith.constant 0 : i32
    %c0_i32_0 = arith.constant 0 : i32
    %c0_i32_1 = arith.constant 0 : i32
    return %c0_i32, %c0_i32_0 : i32, i32
  }
  func.func @transform_5(%arg0: i32) -> (i32, i32) {
    %c0_i32 = arith.constant 0 : i32
    %c0_i32_0 = arith.constant 0 : i32
    %c0_i32_1 = arith.constant 0 : i32
    return %c0_i32, %c0_i32_0 : i32, i32
  }
  func.func @transform_6(%arg0: i32) -> (i32, i32) {
    %c0_i32 = arith.constant 0 : i32
    %c0_i32_0 = arith.constant 0 : i32
    %c0_i32_1 = arith.constant 0 : i32
    return %c0_i32, %c0_i32_0 : i32, i32
  }
  func.func @transform_7(%arg0: i32) -> (i32, i32) {
    %c0_i32 = arith.constant 0 : i32
    %c0_i32_0 = arith.constant 0 : i32
    %c0_i32_1 = arith.constant 0 : i32
    return %c0_i32, %c0_i32_0 : i32, i32
  }
}

module attributes {stable_mosaic.version = 11 : i64} {
  func.func @_global_sa_kernel(%arg0: i32, %arg1: memref<16x8xf32, #tpu.memory_space<vmem>>, %arg2: memref<8x128xf32, #tpu.memory_space<vmem>>, %arg3: memref<1x128xf32, #tpu.memory_space<vmem>>, %arg4: memref<128x128xbf16, #tpu.memory_space<vmem>>, %arg5: memref<1x128xf32, #tpu.memory_space<vmem>>, %arg6: memref<128x128xbf16, #tpu.memory_space<vmem>>, %arg7: memref<1x128xf32, #tpu.memory_space<vmem>>, %arg8: memref<8x128xf32, #tpu.memory_space<vmem>>) attributes {dimension_semantics = [#tpu.dimension_semantics<arbitrary>], iteration_bounds = array<i64: 1>, scalar_prefetch = 0 : i64, scratch_operands = 0 : i64, tpu.core_type = #tpu.core_type<tc>, window_params = [{transform_indices = @transform_0, window_bounds = array<i64: 16, 8>}, {pipeline_mode = #tpu.pipeline_mode<synchronous>, transform_indices = @transform_1, window_bounds = array<i64: 8, 128>}, {pipeline_mode = #tpu.pipeline_mode<synchronous>, transform_indices = @transform_2, window_bounds = array<i64: 1, 128>}, {pipeline_mode = #tpu.pipeline_mode<synchronous>, transform_indices = @transform_3, window_bounds = array<i64: 128, 128>}, {pipeline_mode = #tpu.pipeline_mode<synchronous>, transform_indices = @transform_4, window_bounds = array<i64: 1, 128>}, {pipeline_mode = #tpu.pipeline_mode<synchronous>, transform_indices = @transform_5, window_bounds = array<i64: 128, 128>}, {pipeline_mode = #tpu.pipeline_mode<synchronous>, transform_indices = @transform_6, window_bounds = array<i64: 1, 128>}, {pipeline_mode = #tpu.pipeline_mode<synchronous>, transform_indices = @transform_7, window_bounds = array<i64: 8, 128>}]} {
    %c0_i32 = arith.constant 0 : i32
    %0 = arith.cmpi eq, %arg0, %c0_i32 : i32
    %1 = arith.extui %0 : i1 to i32
    %c0_i32_0 = arith.constant 0 : i32
    %2 = arith.cmpi ne, %1, %c0_i32_0 : i32
    scf.if %2 {
      %cst_29 = arith.constant 0.000000e+00 : f32
      %50 = vector.broadcast %cst_29 : f32 to vector<8x128xf32>
      %c0_30 = arith.constant 0 : index
      %c0_31 = arith.constant 0 : index
      %51 = vector.load %arg8[%c0_30, %c0_31] : memref<8x128xf32, #tpu.memory_space<vmem>>, vector<8x128xf32>
      tpu.vector_store %arg8[%c0_30, %c0_31], %50 {strides = array<i32>} : memref<8x128xf32, #tpu.memory_space<vmem>>, vector<8x128xf32>,
    } else {
    }
    %c0 = arith.constant 0 : index
    %c0_1 = arith.constant 0 : index
    %3 = vector.load %arg1[%c0, %c0_1] : memref<16x8xf32, #tpu.memory_space<vmem>>, vector<16x8xf32>
    %4 = vector.extract_strided_slice %3 {offsets = [0, 7], sizes = [16, 1], strides = [1, 1]} : vector<16x8xf32> to vector<16x1xf32>
    %5 = tpu.bitcast %4 : vector<16x1xf32> -> vector<16x1xi32>
    %c0_2 = arith.constant 0 : index
    %c0_3 = arith.constant 0 : index
    %6 = vector.load %arg2[%c0_2, %c0_3] : memref<8x128xf32, #tpu.memory_space<vmem>>, vector<8x128xf32>
    %cst = arith.constant dense<0.000000e+00> : vector<16x128xf32>
    %7 = tpu.matmul %3, %6, %cst {dimension_numbers = #tpu.dot_dimension_numbers<[1], [0], [0], [1], [0, 0, 1, 1], [], []>} : vector<16x8xf32>, vector<8x128xf32>, vector<16x128xf32> -> vector<16x128xf32>
    %c0_4 = arith.constant 0 : index
    %c0_5 = arith.constant 0 : index
    %8 = vector.load %arg3[%c0_4, %c0_5] : memref<1x128xf32, #tpu.memory_space<vmem>>, vector<1x128xf32>
    %9 = vector.broadcast %8 : vector<1x128xf32> to vector<16x128xf32>
    %10 = arith.addf %7, %9 : vector<16x128xf32>
    %cst_6 = arith.constant 0.000000e+00 : f32
    %11 = vector.broadcast %cst_6 : f32 to vector<16x128xf32>
    %12 = arith.maximumf %10, %11 : vector<16x128xf32>
    %13 = arith.truncf %12 : vector<16x128xf32> to vector<16x128xbf16>
    %c0_7 = arith.constant 0 : index
    %c0_8 = arith.constant 0 : index
    %14 = vector.load %arg4[%c0_7, %c0_8] : memref<128x128xbf16, #tpu.memory_space<vmem>>, vector<128x128xbf16>
    %cst_9 = arith.constant dense<0.000000e+00> : vector<16x128xf32>
    %15 = tpu.matmul %13, %14, %cst_9 {dimension_numbers = #tpu.dot_dimension_numbers<[1], [0], [0], [1], [0, 0, 1, 1], [], []>} : vector<16x128xbf16>, vector<128x128xbf16>, vector<16x128xf32> -> vector<16x128xf32>
    %c0_10 = arith.constant 0 : index
    %c0_11 = arith.constant 0 : index
    %16 = vector.load %arg5[%c0_10, %c0_11] : memref<1x128xf32, #tpu.memory_space<vmem>>, vector<1x128xf32>
    %17 = vector.broadcast %16 : vector<1x128xf32> to vector<16x128xf32>
    %18 = arith.addf %15, %17 : vector<16x128xf32>
    %cst_12 = arith.constant 0.000000e+00 : f32
    %19 = vector.broadcast %cst_12 : f32 to vector<16x128xf32>
    %20 = arith.maximumf %18, %19 : vector<16x128xf32>
    %21 = arith.truncf %20 : vector<16x128xf32> to vector<16x128xbf16>
    %c0_13 = arith.constant 0 : index
    %c0_14 = arith.constant 0 : index
    %22 = vector.load %arg6[%c0_13, %c0_14] : memref<128x128xbf16, #tpu.memory_space<vmem>>, vector<128x128xbf16>
    %cst_15 = arith.constant dense<0.000000e+00> : vector<16x128xf32>
    %23 = tpu.matmul %21, %22, %cst_15 {dimension_numbers = #tpu.dot_dimension_numbers<[1], [0], [0], [1], [0, 0, 1, 1], [], []>} : vector<16x128xbf16>, vector<128x128xbf16>, vector<16x128xf32> -> vector<16x128xf32>
    %c0_16 = arith.constant 0 : index
    %c0_17 = arith.constant 0 : index
    %24 = vector.load %arg7[%c0_16, %c0_17] : memref<1x128xf32, #tpu.memory_space<vmem>>, vector<1x128xf32>
    %25 = vector.broadcast %24 : vector<1x128xf32> to vector<16x128xf32>
    %26 = arith.addf %23, %25 : vector<16x128xf32>
    %cst_18 = arith.constant 0.000000e+00 : f32
    %27 = vector.broadcast %cst_18 : f32 to vector<16x128xf32>
    %28 = arith.maximumf %26, %27 : vector<16x128xf32>
    %c0_i32_19 = arith.constant 0 : i32
    %29 = vector.broadcast %c0_i32_19 : i32 to vector<16x1xi32>
    %30 = arith.cmpi eq, %5, %29 : vector<16x1xi32>
    %cst_20 = arith.constant 0.000000e+00 : f32
    %31 = vector.shape_cast %30 : vector<16x1xi1> to vector<16x1xi1>
    %32 = vector.broadcast %31 : vector<16x1xi1> to vector<16x128xi1>
    %33 = vector.broadcast %cst_20 : f32 to vector<16x128xf32>
    %34 = arith.select %32, %28, %33 : vector<16x128xi1>, vector<16x128xf32>
    %cst_21 = arith.constant dense<0xFF800000> : vector<128xf32>
    %35 = vector.multi_reduction <maximumf>, %34, %cst_21 [0] : vector<16x128xf32> to vector<128xf32>
    %36 = vector.shape_cast %35 : vector<128xf32> to vector<1x128xf32>
    %c1_i32 = arith.constant 1 : i32
    %37 = vector.broadcast %c1_i32 : i32 to vector<16x1xi32>
    %38 = arith.cmpi eq, %5, %37 : vector<16x1xi32>
    %cst_22 = arith.constant 0.000000e+00 : f32
    %39 = vector.shape_cast %38 : vector<16x1xi1> to vector<16x1xi1>
    %40 = vector.broadcast %39 : vector<16x1xi1> to vector<16x128xi1>
    %41 = vector.broadcast %cst_22 : f32 to vector<16x128xf32>
    %42 = arith.select %40, %28, %41 : vector<16x128xi1>, vector<16x128xf32>
    %cst_23 = arith.constant dense<0xFF800000> : vector<128xf32>
    %43 = vector.multi_reduction <maximumf>, %42, %cst_23 [0] : vector<16x128xf32> to vector<128xf32>
    %44 = vector.shape_cast %43 : vector<128xf32> to vector<1x128xf32>
    %cst_24 = arith.constant 0.000000e+00 : f32
    %45 = vector.broadcast %cst_24 : f32 to vector<6x128xf32>
    %46 = tpu.concatenate %36, %44, %45 in 0 : vector<1x128xf32>, vector<1x128xf32>, vector<6x128xf32> -> vector<8x128xf32>
    %c0_25 = arith.constant 0 : index
    %c0_26 = arith.constant 0 : index
    %47 = vector.load %arg8[%c0_25, %c0_26] : memref<8x128xf32, #tpu.memory_space<vmem>>, vector<8x128xf32>
    %48 = arith.maximumf %47, %46 : vector<8x128xf32>
    %c0_27 = arith.constant 0 : index
    %c0_28 = arith.constant 0 : index
    %49 = vector.load %arg8[%c0_27, %c0_28] : memref<8x128xf32, #tpu.memory_space<vmem>>, vector<8x128xf32>
    tpu.vector_store %arg8[%c0_27, %c0_28], %48 {strides = array<i32>} : memref<8x128xf32, #tpu.memory_space<vmem>>, vector<8x128xf32>,
    return
  }
  func.func @transform_0(%arg0: i32) -> (i32, i32) {
    %c0_i32 = arith.constant 0 : i32
    %c0_i32_0 = arith.constant 0 : i32
    return %arg0, %c0_i32 : i32, i32
  }
  func.func @transform_1(%arg0: i32) -> (i32, i32) {
    %c0_i32 = arith.constant 0 : i32
    %c0_i32_0 = arith.constant 0 : i32
    %c0_i32_1 = arith.constant 0 : i32
    return %c0_i32, %c0_i32_0 : i32, i32
  }
  func.func @transform_2(%arg0: i32) -> (i32, i32) {
    %c0_i32 = arith.constant 0 : i32
    %c0_i32_0 = arith.constant 0 : i32
    %c0_i32_1 = arith.constant 0 : i32
    return %c0_i32, %c0_i32_0 : i32, i32
  }
  func.func @transform_3(%arg0: i32) -> (i32, i32) {
    %c0_i32 = arith.constant 0 : i32
    %c0_i32_0 = arith.constant 0 : i32
    %c0_i32_1 = arith.constant 0 : i32
    return %c0_i32, %c0_i32_0 : i32, i32
  }
  func.func @transform_4(%arg0: i32) -> (i32, i32) {
    %c0_i32 = arith.constant 0 : i32
    %c0_i32_0 = arith.constant 0 : i32
    %c0_i32_1 = arith.constant 0 : i32
    return %c0_i32, %c0_i32_0 : i32, i32
  }
  func.func @transform_5(%arg0: i32) -> (i32, i32) {
    %c0_i32 = arith.constant 0 : i32
    %c0_i32_0 = arith.constant 0 : i32
    %c0_i32_1 = arith.constant 0 : i32
    return %c0_i32, %c0_i32_0 : i32, i32
  }
  func.func @transform_6(%arg0: i32) -> (i32, i32) {
    %c0_i32 = arith.constant 0 : i32
    %c0_i32_0 = arith.constant 0 : i32
    %c0_i32_1 = arith.constant 0 : i32
    return %c0_i32, %c0_i32_0 : i32, i32
  }
  func.func @transform_7(%arg0: i32) -> (i32, i32) {
    %c0_i32 = arith.constant 0 : i32
    %c0_i32_0 = arith.constant 0 : i32
    %c0_i32_1 = arith.constant 0 : i32
    return %c0_i32, %c0_i32_0 : i32, i32
  }
}

</mosaic_0001>

<llo_original>
// kernel: tpu_custom_call.1
$region0: #{tpu_custom_call.1}
  #allocation0 [shape = 'u32[]', space=smem, size = 0x4, offset = 0x4, fixed_abs, tag = 'smem constant byte address 0x4 - core index']
  #allocation1 [shape = 'u32[144,128]{1,0:T(1,128)}', space=vmem, size = 0x12000, scoped, tag = 'internal scratch']
  %s0 = inlined_call_operand.vmem [shape: f32[16,8], index: 0, kind: input, shape index: {}]
  %s1 = inlined_call_operand.vmem [shape: f32[8,128], index: 1, kind: input, shape index: {}]
  %s2 = inlined_call_operand.vmem [shape: f32[1,128], index: 2, kind: input, shape index: {}]
  %s3 = inlined_call_operand.hbm [shape: bf16[128,128], index: 3, kind: input, shape index: {}]
  %s4 = inlined_call_operand.vmem [shape: f32[1,128], index: 4, kind: input, shape index: {}]
  %s5 = inlined_call_operand.hbm [shape: bf16[128,128], index: 5, kind: input, shape index: {}]
  %s6 = inlined_call_operand.vmem [shape: f32[1,128], index: 6, kind: input, shape index: {}]
  %s7 = inlined_call_operand.hbm [shape: f32[8,128], index: 7, kind: output, shape index: {}]
  %s8 = sld [smem:[#allocation0]]
  $region50: #{tpu_custom_call.1} parent=0
    _
  %s10 = ssub.s32 1, %s8
  %s11 = scalar_select 0, %s10, %s8
  $region1: #{tpu_custom_call.1} parent=0
    #allocation2 [shape = 'u8[32768]{0}', space=vmem, size = 0x8000, scoped, tag = 'input window, operand 3, single buffered']
    #allocation3 [shape = 's32[1]{0}', space=sflag, size = 0x4, scoped, tag = 'scoped memory for tpu_custom_call.1']
    #allocation4 [shape = 's32[1]{0}', space=sflag, size = 0x4, scoped, tag = 'scoped memory for tpu_custom_call.1']
    #allocation5 [shape = 'u8[32768]{0}', space=vmem, size = 0x8000, scoped, tag = 'input window, operand 5, single buffered']
    #allocation6 [shape = 's32[1]{0}', space=sflag, size = 0x4, scoped, tag = 'scoped memory for tpu_custom_call.1']
    #allocation7 [shape = 'u8[4096]{0}', space=vmem, size = 0x1000, scoped, tag = 'output window, operand 0, single buffered']
    %12 = vsyncpa [#allocation3], 0
    %13 = vsyncpa [#allocation6], 0
    %14 = vsyncpa [#allocation4], 0
    // Predicated region
    $region2: #{tpu_custom_call.1} parent=1 // pred_check
      _
    $region3: #{tpu_custom_call.1} parent=1 // pred_check_branch
      %16 = sbr.rel (0) target = $region5
    $region4: #{tpu_custom_call.1} parent=1 // pred_region
      _
    $region5: #{tpu_custom_call.1} parent=1 // pred_fallthru
      _
    // Predicated region
    $region6: #{tpu_custom_call.1} parent=1 // pred_check
      _
    $region7: #{tpu_custom_call.1} parent=1 // pred_check_branch
      %18 = sbr.rel (0) target = $region9
    $region8: #{tpu_custom_call.1} parent=1 // pred_region
      _
    $region9: #{tpu_custom_call.1} parent=1 // pred_fallthru
      _
    // Predicated region
    $region10: #{tpu_custom_call.1} parent=1 // pred_check
      _
    $region11: #{tpu_custom_call.1} parent=1 // pred_check_branch
      %20 = sbr.rel (0) target = $region13
    $region12: #{tpu_custom_call.1} parent=1 // pred_region
      _
    $region13: #{tpu_custom_call.1} parent=1 // pred_fallthru
      _
    // Predicated region
    $region14: #{tpu_custom_call.1} parent=1 // pred_check
      _
    $region15: #{tpu_custom_call.1} parent=1 // pred_check_branch
      %22 = sbr.rel (0) target = $region17
    $region16: #{tpu_custom_call.1} parent=1 // pred_region
      %s24 = ssub.s32 1024, 1024
      %25 = vsyncadd [#allocation3], %s24
      %s26 = sshll.u32 [#allocation2], 4
      %s27 = int_to_ptr.vmem [resolvable:$true] %s26
      %32 = dma.hbm_to_vmem [thread:$0]  %s3, 1024, %s27, [#allocation3], 64, 64, 4
    $region17: #{tpu_custom_call.1} parent=1 // pred_fallthru
      _
    // Predicated region
    $region18: #{tpu_custom_call.1} parent=1 // pred_check
      _
    $region19: #{tpu_custom_call.1} parent=1 // pred_check_branch
      %34 = sbr.rel (0) target = $region21
    $region20: #{tpu_custom_call.1} parent=1 // pred_region
      _
    $region21: #{tpu_custom_call.1} parent=1 // pred_fallthru
      _
    // Predicated region
    $region22: #{tpu_custom_call.1} parent=1 // pred_check
      _
    $region23: #{tpu_custom_call.1} parent=1 // pred_check_branch
      %36 = sbr.rel (0) target = $region25
    $region24: #{tpu_custom_call.1} parent=1 // pred_region
      %s38 = ssub.s32 1024, 1024
      %39 = vsyncadd [#allocation6], %s38
      %s40 = sshll.u32 [#allocation5], 4
      %s41 = int_to_ptr.vmem [resolvable:$true] %s40
      %46 = dma.hbm_to_vmem [thread:$0]  %s5, 1024, %s41, [#allocation6], 64, 64, 4
    $region25: #{tpu_custom_call.1} parent=1 // pred_fallthru
      _
    // Predicated region
    $region26: #{tpu_custom_call.1} parent=1 // pred_check
      _
    $region27: #{tpu_custom_call.1} parent=1 // pred_check_branch
      %48 = sbr.rel (0) target = $region29
    $region28: #{tpu_custom_call.1} parent=1 // pred_region
      _
    $region29: #{tpu_custom_call.1} parent=1 // pred_fallthru
      _
    // Predicated region
    $region30: #{tpu_custom_call.1} parent=1 // pred_check
      _
    $region31: #{tpu_custom_call.1} parent=1 // pred_check_branch
      %50 = sbr.rel (0) target = $region33
    $region32: #{tpu_custom_call.1} parent=1 // pred_region
      %51 = dma.done [#allocation3], 1024
    $region33: #{tpu_custom_call.1} parent=1 // pred_fallthru
      _
    // Predicated region
    $region34: #{tpu_custom_call.1} parent=1 // pred_check
      _
    $region35: #{tpu_custom_call.1} parent=1 // pred_check_branch
      %53 = sbr.rel (0) target = $region37
    $region36: #{tpu_custom_call.1} parent=1 // pred_region
      %54 = dma.done [#allocation6], 1024
    $region37: #{tpu_custom_call.1} parent=1 // pred_fallthru
      _
    %p56 = scmp.eq.s32.totalorder 0, 0
    // Predicated region
    $region38: #{tpu_custom_call.1} parent=1 // pred_check
      %p57 = pneg %p56
    $region39: #{tpu_custom_call.1} parent=1 // pred_check_branch
      %59 = sbr.rel (%p57) target = $region41
    $region40: #{tpu_custom_call.1} parent=1 // pred_region
      %60 = vst [vmem:[#allocation7] sm:$0xff] 0.0
    $region41: #{tpu_custom_call.1} parent=1 // pred_fallthru
      _
    %v61 = vld [vmem:[%s0] sm:$0xff]
    %v62 = vld [vmem:[%s0 + $0x8] sm:$0xff]
    %v65 = vld [vmem:[%s1] sm:$0xff]
    %v66 = vld [vmem:[%s2] sm:$0x1]
    %v68 = vlaneseq
    %v69 = vshrl.u32 %v68, 7
    %v70 = vsub.s32 0, %v69
    %v71 = vrot.slane %v66, %v70
    %vm73 = vcmask 64512
    %v74 = vsel %vm73, %v61, 0
    %v76 = vsel %vm73, %v62, 0
    %78 = vmatprep.subr.mxu0 0.0
    %79 = vmatpush1.msra.mxu0 %v65
    %80 = vmatprep.subr.mxu0 0.0
    %81 = vmatpush1.msra.mxu0 0.0
    %82 = vmatprep.subr.mxu0 0.0
    %83 = vmatpush1.msra.mxu0 0.0
    %84 = vmatprep.subr.mxu0 0.0
    %85 = vmatpush1.msra.mxu0 0.0
    %86 = vmatprep.subr.mxu0 0.0
    %87 = vmatpush1.msra.mxu0 0.0
    %88 = vmatprep.subr.mxu0 0.0
    %89 = vmatpush1.msra.mxu0 0.0
    %90 = vmatprep.subr.mxu0 0.0
    %91 = vmatpush1.msra.mxu0 0.0
    %92 = vmatprep.subr.mxu0 0.0
    %93 = vmatpush1.msra.mxu0 0.0
    %94 = vmatprep.subr.mxu0 0.0
    %95 = vmatpush1.msra.mxu0 0.0
    %96 = vmatprep.subr.mxu0 0.0
    %97 = vmatpush1.msra.mxu0 0.0
    %98 = vmatprep.subr.mxu0 0.0
    %99 = vmatpush1.msra.mxu0 0.0
    %100 = vmatprep.subr.mxu0 0.0
    %101 = vmatpush1.msra.mxu0 0.0
    %102 = vmatprep.subr.mxu0 0.0
    %103 = vmatpush1.msra.mxu0 0.0
    %104 = vmatprep.subr.mxu0 0.0
    %105 = vmatpush1.msra.mxu0 0.0
    %106 = vmatprep.subr.mxu0 0.0
    %107 = vmatpush1.msra.mxu0 0.0
    %108 = vmatprep.subr.mxu0 0.0
    %109 = vmatpush1.msra.mxu0 0.0
    %110 = vmatprep.subr.mxu0 0.0
    %111 = vmatpush1.msra.mxu0 0.0
    %112 = vmatprep.subr.mxu0 0.0
    %113 = vmatpush1.msra.mxu0 0.0
    %114 = vmatprep.subr.mxu0 0.0
    %115 = vmatpush1.msra.mxu0 0.0
    %116 = vmatprep.subr.mxu0 0.0
    %117 = vmatpush1.msra.mxu0 0.0
    %118 = vmatprep.subr.mxu0 0.0
    %119 = vmatpush1.msra.mxu0 0.0
    %120 = vmatprep.subr.mxu0 0.0
    %121 = vmatpush1.msra.mxu0 0.0
    %122 = vmatprep.subr.mxu0 0.0
    %123 = vmatpush1.msra.mxu0 0.0
    %124 = vmatprep.subr.mxu0 0.0
    %125 = vmatpush1.msra.mxu0 0.0
    %126 = vmatprep.subr.mxu0 0.0
    %127 = vmatpush1.msra.mxu0 0.0
    %128 = vmatprep.subr.mxu0 0.0
    %129 = vmatpush1.msra.mxu0 0.0
    %130 = vmatprep.subr.mxu0 0.0
    %131 = vmatpush1.msra.mxu0 0.0
    %132 = vmatprep.subr.mxu0 0.0
    %133 = vmatpush1.msra.mxu0 0.0
    %134 = vmatprep.subr.mxu0 0.0
    %135 = vmatpush1.msra.mxu0 0.0
    %136 = vmatprep.subr.mxu0 0.0
    %137 = vmatpush1.msra.mxu0 0.0
    %138 = vmatprep.subr.mxu0 0.0
    %139 = vmatpush1.msra.mxu0 0.0
    %140 = vmatprep.subr.mxu0 0.0
    %141 = vmatpush1.msra.mxu0 0.0
    %142 = vmatprep.mubr.f32.mxu0 0.0
    %143 = vmatmul.mubr.f32.gmra.mrb[0].mxu0 %v74
    %v144 = vpop.f32.mrb[0].mxu0
    %v145 = vadd.f32 %v71, %v144
    %v146 = vpop.f32.mrb[0].mxu0
    %147 = vmatprep.mubr.f32.mxu0 0.0
    %148 = vmatmul.mubr.f32.gmra.mrb[0].mxu0 %v76
    %v149 = vpop.f32.mrb[0].mxu0
    %v150 = vadd.f32 %v71, %v149
    %v151 = vpop.f32.mrb[0].mxu0
    %152 = vdwg.mxu0
    %v153 = vmax.f32 %v145, 0.0
    %v154 = vmax.f32 %v150, 0.0
    %v155 = vpack.c.bf16 %v154, %v153
    %v156 = vld [vmem:[#allocation2] sm:$0xf]
    %v157 = vld [vmem:[#allocation2 + $0x4] sm:$0xf]
    %v158 = vld [vmem:[#allocation2 + $0x8] sm:$0xf]
    %v159 = vld [vmem:[#allocation2 + $0xc] sm:$0xf]
    %v160 = vld [vmem:[#allocation2 + $0x10] sm:$0xf]
    %v161 = vld [vmem:[#allocation2 + $0x14] sm:$0xf]
    %v162 = vld [vmem:[#allocation2 + $0x18] sm:$0xf]
    %v163 = vld [vmem:[#allocation2 + $0x1c] sm:$0xf]
    %v164 = vld [vmem:[#allocation2 + $0x20] sm:$0xf]
    %v165 = vld [vmem:[#allocation2 + $0x24] sm:$0xf]
    %v166 = vld [vmem:[#allocation2 + $0x28] sm:$0xf]
    %v167 = vld [vmem:[#allocation2 + $0x2c] sm:$0xf]
    %v168 = vld [vmem:[#allocation2 + $0x30] sm:$0xf]
    %v169 = vld [vmem:[#allocation2 + $0x34] sm:$0xf]
    %v170 = vld [vmem:[#allocation2 + $0x38] sm:$0xf]
    %v171 = vld [vmem:[#allocation2 + $0x3c] sm:$0xf]
    %v172 = vld [vmem:[%s4] sm:$0x1]
    %v174 = vlaneseq
    %v175 = vshrl.u32 %v174, 7
    %v176 = vsub.s32 0, %v175
    %v177 = vrot.slane %v172, %v176
    %v195 = vunpack.c.l.b16 %v156
    %v196 = vunpack.c.l.b16 %v157
    %v197 = vunpack.c.l.b16 %v158
    %v198 = vunpack.c.l.b16 %v159
    %v199 = vunpack.c.l.b16 %v160
    %v200 = vunpack.c.l.b16 %v161
    %v201 = vunpack.c.l.b16 %v162
    %v202 = vunpack.c.l.b16 %v163
    %v203 = vunpack.c.l.b16 %v164
    %v204 = vunpack.c.l.b16 %v165
    %v205 = vunpack.c.l.b16 %v166
    %v206 = vunpack.c.l.b16 %v167
    %v207 = vunpack.c.l.b16 %v168
    %v208 = vunpack.c.l.b16 %v169
    %v209 = vunpack.c.l.b16 %v170
    %v210 = vunpack.c.l.b16 %v171
    %v211 = vpack.c.b16 %v196, %v195
    %v212 = vpack.c.b16 %v198, %v197
    %v213 = vpack.c.b16 %v200, %v199
    %v214 = vpack.c.b16 %v202, %v201
    %v215 = vpack.c.b16 %v204, %v203
    %v216 = vpack.c.b16 %v206, %v205
    %v217 = vpack.c.b16 %v208, %v207
    %v218 = vpack.c.b16 %v210, %v209
    %227 = vmatprep.subr.bf16.mxu0 0
    %228 = vmatpush1.bf16.msra.mxu0 %v211
    %229 = vmatprep.subr.bf16.mxu0 0
    %230 = vmatpush1.bf16.msra.mxu0 %v212
    %231 = vmatprep.subr.bf16.mxu0 0
    %232 = vmatpush1.bf16.msra.mxu0 %v213
    %233 = vmatprep.subr.bf16.mxu0 0
    %234 = vmatpush1.bf16.msra.mxu0 %v214
    %235 = vmatprep.subr.bf16.mxu0 0
    %236 = vmatpush1.bf16.msra.mxu0 %v215
    %237 = vmatprep.subr.bf16.mxu0 0
    %238 = vmatpush1.bf16.msra.mxu0 %v216
    %239 = vmatprep.subr.bf16.mxu0 0
    %240 = vmatpush1.bf16.msra.mxu0 %v217
    %241 = vmatprep.subr.bf16.mxu0 0
    %242 = vmatpush1.bf16.msra.mxu0 %v218
    %243 = vmatprep.subr.bf16.mxu0 0
    %244 = vmatpush1.bf16.msra.mxu0 0
    %245 = vmatprep.subr.bf16.mxu0 0
    %246 = vmatpush1.bf16.msra.mxu0 0
    %247 = vmatprep.subr.bf16.mxu0 0
    %248 = vmatpush1.bf16.msra.mxu0 0
    %249 = vmatprep.subr.bf16.mxu0 0
    %250 = vmatpush1.bf16.msra.mxu0 0
    %251 = vmatprep.subr.bf16.mxu0 0
    %252 = vmatpush1.bf16.msra.mxu0 0
    %253 = vmatprep.subr.bf16.mxu0 0
    %254 = vmatpush1.bf16.msra.mxu0 0
    %255 = vmatprep.subr.bf16.mxu0 0
    %256 = vmatpush1.bf16.msra.mxu0 0
    %257 = vmatprep.subr.bf16.mxu0 0
    %258 = vmatpush1.bf16.msra.mxu0 0
    %259 = vmatprep.mubr.bf16.mxu0 0
    %260 = vmatmul.mubr.bf16.gmra.mrb[0].mxu0 %v155
    %v261 = vpop.f32.mrb[0].mxu0
    %v262 = vadd.f32 %v177, %v261
    %v263 = vpop.f32.mrb[0].mxu0
    %v264 = vpop.f32.mrb[0].mxu0
    %v265 = vadd.f32 %v177, %v264
    %v266 = vpop.f32.mrb[0].mxu0
    %267 = vdwg.mxu0
    %v268 = vmax.f32 %v262, 0.0
    %v269 = vmax.f32 %v265, 0.0
    %v270 = vpack.c.bf16 %v269, %v268
    %v271 = vld [vmem:[#allocation5] sm:$0xf]
    %v272 = vld [vmem:[#allocation5 + $0x4] sm:$0xf]
    %v273 = vld [vmem:[#allocation5 + $0x8] sm:$0xf]
    %v274 = vld [vmem:[#allocation5 + $0xc] sm:$0xf]
    %v275 = vld [vmem:[#allocation5 + $0x10] sm:$0xf]
    %v276 = vld [vmem:[#allocation5 + $0x14] sm:$0xf]
    %v277 = vld [vmem:[#allocation5 + $0x18] sm:$0xf]
    %v278 = vld [vmem:[#allocation5 + $0x1c] sm:$0xf]
    %v279 = vld [vmem:[#allocation5 + $0x20] sm:$0xf]
    %v280 = vld [vmem:[#allocation5 + $0x24] sm:$0xf]
    %v281 = vld [vmem:[#allocation5 + $0x28] sm:$0xf]
    %v282 = vld [vmem:[#allocation5 + $0x2c] sm:$0xf]
    %v283 = vld [vmem:[#allocation5 + $0x30] sm:$0xf]
    %v284 = vld [vmem:[#allocation5 + $0x34] sm:$0xf]
    %v285 = vld [vmem:[#allocation5 + $0x38] sm:$0xf]
    %v286 = vld [vmem:[#allocation5 + $0x3c] sm:$0xf]
    %v287 = vld [vmem:[%s6] sm:$0x1]
    %v289 = vlaneseq
    %v290 = vshrl.u32 %v289, 7
    %v291 = vsub.s32 0, %v290
    %v292 = vrot.slane %v287, %v291
    %v310 = vunpack.c.l.b16 %v271
    %v311 = vunpack.c.l.b16 %v272
    %v312 = vunpack.c.l.b16 %v273
    %v313 = vunpack.c.l.b16 %v274
    %v314 = vunpack.c.l.b16 %v275
    %v315 = vunpack.c.l.b16 %v276
    %v316 = vunpack.c.l.b16 %v277
    %v317 = vunpack.c.l.b16 %v278
    %v318 = vunpack.c.l.b16 %v279
    %v319 = vunpack.c.l.b16 %v280
    %v320 = vunpack.c.l.b16 %v281
    %v321 = vunpack.c.l.b16 %v282
    %v322 = vunpack.c.l.b16 %v283
    %v323 = vunpack.c.l.b16 %v284
    %v324 = vunpack.c.l.b16 %v285
    %v325 = vunpack.c.l.b16 %v286
    %v326 = vpack.c.b16 %v311, %v310
    %v327 = vpack.c.b16 %v313, %v312
    %v328 = vpack.c.b16 %v315, %v314
    %v329 = vpack.c.b16 %v317, %v316
    %v330 = vpack.c.b16 %v319, %v318
    %v331 = vpack.c.b16 %v321, %v320
    %v332 = vpack.c.b16 %v323, %v322
    %v333 = vpack.c.b16 %v325, %v324
    %342 = vmatprep.subr.bf16.mxu0 0
    %343 = vmatpush1.bf16.msra.mxu0 %v326
    %344 = vmatprep.subr.bf16.mxu0 0
    %345 = vmatpush1.bf16.msra.mxu0 %v327
    %346 = vmatprep.subr.bf16.mxu0 0
    %347 = vmatpush1.bf16.msra.mxu0 %v328
    %348 = vmatprep.subr.bf16.mxu0 0
    %349 = vmatpush1.bf16.msra.mxu0 %v329
    %350 = vmatprep.subr.bf16.mxu0 0
    %351 = vmatpush1.bf16.msra.mxu0 %v330
    %352 = vmatprep.subr.bf16.mxu0 0
    %353 = vmatpush1.bf16.msra.mxu0 %v331
    %354 = vmatprep.subr.bf16.mxu0 0
    %355 = vmatpush1.bf16.msra.mxu0 %v332
    %356 = vmatprep.subr.bf16.mxu0 0
    %357 = vmatpush1.bf16.msra.mxu0 %v333
    %358 = vmatprep.subr.bf16.mxu0 0
    %359 = vmatpush1.bf16.msra.mxu0 0
    %360 = vmatprep.subr.bf16.mxu0 0
    %361 = vmatpush1.bf16.msra.mxu0 0
    %362 = vmatprep.subr.bf16.mxu0 0
    %363 = vmatpush1.bf16.msra.mxu0 0
    %364 = vmatprep.subr.bf16.mxu0 0
    %365 = vmatpush1.bf16.msra.mxu0 0
    %366 = vmatprep.subr.bf16.mxu0 0
    %367 = vmatpush1.bf16.msra.mxu0 0
    %368 = vmatprep.subr.bf16.mxu0 0
    %369 = vmatpush1.bf16.msra.mxu0 0
    %370 = vmatprep.subr.bf16.mxu0 0
    %371 = vmatpush1.bf16.msra.mxu0 0
    %372 = vmatprep.subr.bf16.mxu0 0
    %373 = vmatpush1.bf16.msra.mxu0 0
    %374 = vmatprep.mubr.bf16.mxu0 0
    %375 = vmatmul.mubr.bf16.gmra.mrb[0].mxu0 %v270
    %v376 = vpop.f32.mrb[0].mxu0
    %v377 = vadd.f32 %v292, %v376
    %v378 = vpop.f32.mrb[0].mxu0
    %v379 = vpop.f32.mrb[0].mxu0
    %v380 = vadd.f32 %v292, %v379
    %v381 = vpop.f32.mrb[0].mxu0
    %382 = vdwg.mxu0
    %v383 = vmax.f32 %v377, 0.0
    %v384 = vmax.f32 %v380, 0.0
    %vm385 = vcmp.eq.s32.totalorder %v61, 0
    %vm386 = vcmp.eq.s32.totalorder %v62, 0
    %v387 = vsel %vm385, 1, 0
    %v388 = vsel %vm386, 1, 0
    %389 = vset.pattern.permute.xlu0 7
    %390 = vperm.xlu0 %389, %v387
    %v391 = vpop.permute.xlu0 %390
    %392 = vset.pattern.permute.xlu0 7
    %393 = vperm.xlu0 %392, %v388
    %v394 = vpop.permute.xlu0 %393
    %vm395 = vcmp.eq.s32.totalorder %v391, 1
    %vm396 = vcmp.eq.s32.totalorder %v394, 1
    %v397 = vsel %vm395, %v383, 0.0
    %v398 = vsel %vm396, %v384, 0.0
    %v399 = vmax.f32 %v397, %v398
    %v400 = vrot.slane %v399, 4
    %v401 = vmax.f32 %v399, %v400
    %v402 = vrot.slane %v401, 2
    %v403 = vmax.f32 %v401, %v402
    %v404 = vrot.slane %v403, 1
    %v405 = vmax.f32 %v403, %v404
    %vm406 = vcmp.eq.s32.totalorder %v61, 1
    %vm407 = vcmp.eq.s32.totalorder %v62, 1
    %v408 = vsel %vm406, 1, 0
    %v409 = vsel %vm407, 1, 0
    %410 = vset.pattern.permute.xlu0 7
    %411 = vperm.xlu0 %410, %v408
    %v412 = vpop.permute.xlu0 %411
    %413 = vset.pattern.permute.xlu0 7
    %414 = vperm.xlu0 %413, %v409
    %v415 = vpop.permute.xlu0 %414
    %vm416 = vcmp.eq.s32.totalorder %v412, 1
    %vm417 = vcmp.eq.s32.totalorder %v415, 1
    %v418 = vsel %vm416, %v383, 0.0
    %v419 = vsel %vm417, %v384, 0.0
    %v420 = vmax.f32 %v418, %v419
    %v421 = vrot.slane %v420, 4
    %v422 = vmax.f32 %v420, %v421
    %v423 = vrot.slane %v422, 2
    %v424 = vmax.f32 %v422, %v423
    %v425 = vrot.slane %v424, 1
    %v426 = vmax.f32 %v424, %v425
    %vm427 = vcmask 1040384
    %v428 = vsel %vm427, %v405, %v426
    %vm429 = vcmask 1041408
    %v430 = vsel %vm429, %v428, 0.0
    %v431 = vld [vmem:[#allocation7] sm:$0xff]
    %v432 = vmax.f32 %v431, %v430
    %433 = vst [vmem:[#allocation7] sm:$0xff] %v432
    // Predicated region
    $region42: #{tpu_custom_call.1} parent=1 // pred_check
      _
    $region43: #{tpu_custom_call.1} parent=1 // pred_check_branch
      %435 = sbr.rel (0) target = $region45
    $region44: #{tpu_custom_call.1} parent=1 // pred_region
      %s437 = ssub.s32 128, 128
      %438 = vsyncadd [#allocation4], %s437
      %s440 = sshll.u32 [#allocation7], 4
      %s441 = int_to_ptr.vmem [resolvable:$true] %s440
      %443 = dma.vmem_to_hbm [thread:$0]  %s441, 128, %s7, [#allocation4]
    $region45: #{tpu_custom_call.1} parent=1 // pred_fallthru
      _
    // Predicated region
    $region46: #{tpu_custom_call.1} parent=1 // pred_check
      _
    $region47: #{tpu_custom_call.1} parent=1 // pred_check_branch
      %445 = sbr.rel (0) target = $region49
    $region48: #{tpu_custom_call.1} parent=1 // pred_region
      %446 = dma.done [#allocation4], 128
    $region49: #{tpu_custom_call.1} parent=1 // pred_fallthru
      _
    %447 = vsyncpa [#allocation3], 1
    %448 = vsyncpa [#allocation6], 1
    %449 = vsyncpa [#allocation4], 1

// kernel: tpu_custom_call.1
$region0: #{tpu_custom_call.1}
  #allocation0 [shape = 'u32[]', space=smem, size = 0x4, offset = 0x4, fixed_abs, tag = 'smem constant byte address 0x4 - core index']
  #allocation1 [shape = 'u32[144,128]{1,0:T(1,128)}', space=vmem, size = 0x12000, scoped, tag = 'internal scratch']
  %s0 = inlined_call_operand.vmem [shape: f32[16,8], index: 0, kind: input, shape index: {}]
  %s1 = inlined_call_operand.vmem [shape: f32[8,128], index: 1, kind: input, shape index: {}]
  %s2 = inlined_call_operand.vmem [shape: f32[1,128], index: 2, kind: input, shape index: {}]
  %s3 = inlined_call_operand.hbm [shape: bf16[128,128], index: 3, kind: input, shape index: {}]
  %s4 = inlined_call_operand.vmem [shape: f32[1,128], index: 4, kind: input, shape index: {}]
  %s5 = inlined_call_operand.hbm [shape: bf16[128,128], index: 5, kind: input, shape index: {}]
  %s6 = inlined_call_operand.vmem [shape: f32[1,128], index: 6, kind: input, shape index: {}]
  %s7 = inlined_call_operand.hbm [shape: f32[8,128], index: 7, kind: output, shape index: {}]
  %s8 = sld [smem:[#allocation0]]
  $region50: #{tpu_custom_call.1} parent=0
    _
  %s10 = ssub.s32 1, %s8
  %s11 = scalar_select 0, %s10, %s8
  $region1: #{tpu_custom_call.1} parent=0
    #allocation2 [shape = 'u8[32768]{0}', space=vmem, size = 0x8000, scoped, tag = 'input window, operand 3, single buffered']
    #allocation3 [shape = 's32[1]{0}', space=sflag, size = 0x4, scoped, tag = 'scoped memory for tpu_custom_call.1']
    #allocation4 [shape = 's32[1]{0}', space=sflag, size = 0x4, scoped, tag = 'scoped memory for tpu_custom_call.1']
    #allocation5 [shape = 'u8[32768]{0}', space=vmem, size = 0x8000, scoped, tag = 'input window, operand 5, single buffered']
    #allocation6 [shape = 's32[1]{0}', space=sflag, size = 0x4, scoped, tag = 'scoped memory for tpu_custom_call.1']
    #allocation7 [shape = 'u8[4096]{0}', space=vmem, size = 0x1000, scoped, tag = 'output window, operand 0, single buffered']
    %12 = vsyncpa [#allocation3], 0
    %13 = vsyncpa [#allocation6], 0
    %14 = vsyncpa [#allocation4], 0
    // Predicated region
    $region2: #{tpu_custom_call.1} parent=1 // pred_check
      _
    $region3: #{tpu_custom_call.1} parent=1 // pred_check_branch
      %16 = sbr.rel (0) target = $region5
    $region4: #{tpu_custom_call.1} parent=1 // pred_region
      _
    $region5: #{tpu_custom_call.1} parent=1 // pred_fallthru
      _
    // Predicated region
    $region6: #{tpu_custom_call.1} parent=1 // pred_check
      _
    $region7: #{tpu_custom_call.1} parent=1 // pred_check_branch
      %18 = sbr.rel (0) target = $region9
    $region8: #{tpu_custom_call.1} parent=1 // pred_region
      _
    $region9: #{tpu_custom_call.1} parent=1 // pred_fallthru
      _
    // Predicated region
    $region10: #{tpu_custom_call.1} parent=1 // pred_check
      _
    $region11: #{tpu_custom_call.1} parent=1 // pred_check_branch
      %20 = sbr.rel (0) target = $region13
    $region12: #{tpu_custom_call.1} parent=1 // pred_region
      _
    $region13: #{tpu_custom_call.1} parent=1 // pred_fallthru
      _
    // Predicated region
    $region14: #{tpu_custom_call.1} parent=1 // pred_check
      _
    $region15: #{tpu_custom_call.1} parent=1 // pred_check_branch
      %22 = sbr.rel (0) target = $region17
    $region16: #{tpu_custom_call.1} parent=1 // pred_region
      %s24 = ssub.s32 1024, 1024
      %25 = vsyncadd [#allocation3], %s24
      %s26 = sshll.u32 [#allocation2], 4
      %s27 = int_to_ptr.vmem [resolvable:$true] %s26
      %32 = dma.hbm_to_vmem [thread:$0]  %s3, 1024, %s27, [#allocation3], 64, 64, 4
    $region17: #{tpu_custom_call.1} parent=1 // pred_fallthru
      _
    // Predicated region
    $region18: #{tpu_custom_call.1} parent=1 // pred_check
      _
    $region19: #{tpu_custom_call.1} parent=1 // pred_check_branch
      %34 = sbr.rel (0) target = $region21
    $region20: #{tpu_custom_call.1} parent=1 // pred_region
      _
    $region21: #{tpu_custom_call.1} parent=1 // pred_fallthru
      _
    // Predicated region
    $region22: #{tpu_custom_call.1} parent=1 // pred_check
      _
    $region23: #{tpu_custom_call.1} parent=1 // pred_check_branch
      %36 = sbr.rel (0) target = $region25
    $region24: #{tpu_custom_call.1} parent=1 // pred_region
      %s38 = ssub.s32 1024, 1024
      %39 = vsyncadd [#allocation6], %s38
      %s40 = sshll.u32 [#allocation5], 4
      %s41 = int_to_ptr.vmem [resolvable:$true] %s40
      %46 = dma.hbm_to_vmem [thread:$0]  %s5, 1024, %s41, [#allocation6], 64, 64, 4
    $region25: #{tpu_custom_call.1} parent=1 // pred_fallthru
      _
    // Predicated region
    $region26: #{tpu_custom_call.1} parent=1 // pred_check
      _
    $region27: #{tpu_custom_call.1} parent=1 // pred_check_branch
      %48 = sbr.rel (0) target = $region29
    $region28: #{tpu_custom_call.1} parent=1 // pred_region
      _
    $region29: #{tpu_custom_call.1} parent=1 // pred_fallthru
      _
    // Predicated region
    $region30: #{tpu_custom_call.1} parent=1 // pred_check
      _
    $region31: #{tpu_custom_call.1} parent=1 // pred_check_branch
      %50 = sbr.rel (0) target = $region33
    $region32: #{tpu_custom_call.1} parent=1 // pred_region
      %51 = dma.done [#allocation3], 1024
    $region33: #{tpu_custom_call.1} parent=1 // pred_fallthru
      _
    // Predicated region
    $region34: #{tpu_custom_call.1} parent=1 // pred_check
      _
    $region35: #{tpu_custom_call.1} parent=1 // pred_check_branch
      %53 = sbr.rel (0) target = $region37
    $region36: #{tpu_custom_call.1} parent=1 // pred_region
      %54 = dma.done [#allocation6], 1024
    $region37: #{tpu_custom_call.1} parent=1 // pred_fallthru
      _
    %p56 = scmp.eq.s32.totalorder 0, 0
    // Predicated region
    $region38: #{tpu_custom_call.1} parent=1 // pred_check
      %p57 = pneg %p56
    $region39: #{tpu_custom_call.1} parent=1 // pred_check_branch
      %59 = sbr.rel (%p57) target = $region41
    $region40: #{tpu_custom_call.1} parent=1 // pred_region
      %60 = vst [vmem:[#allocation7] sm:$0xff] 0.0
    $region41: #{tpu_custom_call.1} parent=1 // pred_fallthru
      _
    %v61 = vld [vmem:[%s0] sm:$0xff]
    %v62 = vld [vmem:[%s0 + $0x8] sm:$0xff]
    %v65 = vld [vmem:[%s1] sm:$0xff]
    %v66 = vld [vmem:[%s2] sm:$0x1]
    %v68 = vlaneseq
    %v69 = vshrl.u32 %v68, 7
    %v70 = vsub.s32 0, %v69
    %v71 = vrot.slane %v66, %v70
    %vm73 = vcmask 64512
    %v74 = vsel %vm73, %v61, 0
    %v76 = vsel %vm73, %v62, 0
    %78 = vmatprep.subr.mxu0 0.0
    %79 = vmatpush1.msra.mxu0 %v65
    %80 = vmatprep.subr.mxu0 0.0
    %81 = vmatpush1.msra.mxu0 0.0
    %82 = vmatprep.subr.mxu0 0.0
    %83 = vmatpush1.msra.mxu0 0.0
    %84 = vmatprep.subr.mxu0 0.0
    %85 = vmatpush1.msra.mxu0 0.0
    %86 = vmatprep.subr.mxu0 0.0
    %87 = vmatpush1.msra.mxu0 0.0
    %88 = vmatprep.subr.mxu0 0.0
    %89 = vmatpush1.msra.mxu0 0.0
    %90 = vmatprep.subr.mxu0 0.0
    %91 = vmatpush1.msra.mxu0 0.0
    %92 = vmatprep.subr.mxu0 0.0
    %93 = vmatpush1.msra.mxu0 0.0
    %94 = vmatprep.subr.mxu0 0.0
    %95 = vmatpush1.msra.mxu0 0.0
    %96 = vmatprep.subr.mxu0 0.0
    %97 = vmatpush1.msra.mxu0 0.0
    %98 = vmatprep.subr.mxu0 0.0
    %99 = vmatpush1.msra.mxu0 0.0
    %100 = vmatprep.subr.mxu0 0.0
    %101 = vmatpush1.msra.mxu0 0.0
    %102 = vmatprep.subr.mxu0 0.0
    %103 = vmatpush1.msra.mxu0 0.0
    %104 = vmatprep.subr.mxu0 0.0
    %105 = vmatpush1.msra.mxu0 0.0
    %106 = vmatprep.subr.mxu0 0.0
    %107 = vmatpush1.msra.mxu0 0.0
    %108 = vmatprep.subr.mxu0 0.0
    %109 = vmatpush1.msra.mxu0 0.0
    %110 = vmatprep.subr.mxu0 0.0
    %111 = vmatpush1.msra.mxu0 0.0
    %112 = vmatprep.subr.mxu0 0.0
    %113 = vmatpush1.msra.mxu0 0.0
    %114 = vmatprep.subr.mxu0 0.0
    %115 = vmatpush1.msra.mxu0 0.0
    %116 = vmatprep.subr.mxu0 0.0
    %117 = vmatpush1.msra.mxu0 0.0
    %118 = vmatprep.subr.mxu0 0.0
    %119 = vmatpush1.msra.mxu0 0.0
    %120 = vmatprep.subr.mxu0 0.0
    %121 = vmatpush1.msra.mxu0 0.0
    %122 = vmatprep.subr.mxu0 0.0
    %123 = vmatpush1.msra.mxu0 0.0
    %124 = vmatprep.subr.mxu0 0.0
    %125 = vmatpush1.msra.mxu0 0.0
    %126 = vmatprep.subr.mxu0 0.0
    %127 = vmatpush1.msra.mxu0 0.0
    %128 = vmatprep.subr.mxu0 0.0
    %129 = vmatpush1.msra.mxu0 0.0
    %130 = vmatprep.subr.mxu0 0.0
    %131 = vmatpush1.msra.mxu0 0.0
    %132 = vmatprep.subr.mxu0 0.0
    %133 = vmatpush1.msra.mxu0 0.0
    %134 = vmatprep.subr.mxu0 0.0
    %135 = vmatpush1.msra.mxu0 0.0
    %136 = vmatprep.subr.mxu0 0.0
    %137 = vmatpush1.msra.mxu0 0.0
    %138 = vmatprep.subr.mxu0 0.0
    %139 = vmatpush1.msra.mxu0 0.0
    %140 = vmatprep.subr.mxu0 0.0
    %141 = vmatpush1.msra.mxu0 0.0
    %142 = vmatprep.mubr.f32.mxu0 0.0
    %143 = vmatmul.mubr.f32.gmra.mrb[0].mxu0 %v74
    %v144 = vpop.f32.mrb[0].mxu0
    %v145 = vadd.f32 %v71, %v144
    %v146 = vpop.f32.mrb[0].mxu0
    %147 = vmatprep.mubr.f32.mxu0 0.0
    %148 = vmatmul.mubr.f32.gmra.mrb[0].mxu0 %v76
    %v149 = vpop.f32.mrb[0].mxu0
    %v150 = vadd.f32 %v71, %v149
    %v151 = vpop.f32.mrb[0].mxu0
    %152 = vdwg.mxu0
    %v153 = vmax.f32 %v145, 0.0
    %v154 = vmax.f32 %v150, 0.0
    %v155 = vpack.c.bf16 %v154, %v153
    %v156 = vld [vmem:[#allocation2] sm:$0xf]
    %v157 = vld [vmem:[#allocation2 + $0x4] sm:$0xf]
    %v158 = vld [vmem:[#allocation2 + $0x8] sm:$0xf]
    %v159 = vld [vmem:[#allocation2 + $0xc] sm:$0xf]
    %v160 = vld [vmem:[#allocation2 + $0x10] sm:$0xf]
    %v161 = vld [vmem:[#allocation2 + $0x14] sm:$0xf]
    %v162 = vld [vmem:[#allocation2 + $0x18] sm:$0xf]
    %v163 = vld [vmem:[#allocation2 + $0x1c] sm:$0xf]
    %v164 = vld [vmem:[#allocation2 + $0x20] sm:$0xf]
    %v165 = vld [vmem:[#allocation2 + $0x24] sm:$0xf]
    %v166 = vld [vmem:[#allocation2 + $0x28] sm:$0xf]
    %v167 = vld [vmem:[#allocation2 + $0x2c] sm:$0xf]
    %v168 = vld [vmem:[#allocation2 + $0x30] sm:$0xf]
    %v169 = vld [vmem:[#allocation2 + $0x34] sm:$0xf]
    %v170 = vld [vmem:[#allocation2 + $0x38] sm:$0xf]
    %v171 = vld [vmem:[#allocation2 + $0x3c] sm:$0xf]
    %v172 = vld [vmem:[%s4] sm:$0x1]
    %v174 = vlaneseq
    %v175 = vshrl.u32 %v174, 7
    %v176 = vsub.s32 0, %v175
    %v177 = vrot.slane %v172, %v176
    %v195 = vunpack.c.l.b16 %v156
    %v196 = vunpack.c.l.b16 %v157
    %v197 = vunpack.c.l.b16 %v158
    %v198 = vunpack.c.l.b16 %v159
    %v199 = vunpack.c.l.b16 %v160
    %v200 = vunpack.c.l.b16 %v161
    %v201 = vunpack.c.l.b16 %v162
    %v202 = vunpack.c.l.b16 %v163
    %v203 = vunpack.c.l.b16 %v164
    %v204 = vunpack.c.l.b16 %v165
    %v205 = vunpack.c.l.b16 %v166
    %v206 = vunpack.c.l.b16 %v167
    %v207 = vunpack.c.l.b16 %v168
    %v208 = vunpack.c.l.b16 %v169
    %v209 = vunpack.c.l.b16 %v170
    %v210 = vunpack.c.l.b16 %v171
    %v211 = vpack.c.b16 %v196, %v195
    %v212 = vpack.c.b16 %v198, %v197
    %v213 = vpack.c.b16 %v200, %v199
    %v214 = vpack.c.b16 %v202, %v201
    %v215 = vpack.c.b16 %v204, %v203
    %v216 = vpack.c.b16 %v206, %v205
    %v217 = vpack.c.b16 %v208, %v207
    %v218 = vpack.c.b16 %v210, %v209
    %227 = vmatprep.subr.bf16.mxu0 0
    %228 = vmatpush1.bf16.msra.mxu0 %v211
    %229 = vmatprep.subr.bf16.mxu0 0
    %230 = vmatpush1.bf16.msra.mxu0 %v212
    %231 = vmatprep.subr.bf16.mxu0 0
    %232 = vmatpush1.bf16.msra.mxu0 %v213
    %233 = vmatprep.subr.bf16.mxu0 0
    %234 = vmatpush1.bf16.msra.mxu0 %v214
    %235 = vmatprep.subr.bf16.mxu0 0
    %236 = vmatpush1.bf16.msra.mxu0 %v215
    %237 = vmatprep.subr.bf16.mxu0 0
    %238 = vmatpush1.bf16.msra.mxu0 %v216
    %239 = vmatprep.subr.bf16.mxu0 0
    %240 = vmatpush1.bf16.msra.mxu0 %v217
    %241 = vmatprep.subr.bf16.mxu0 0
    %242 = vmatpush1.bf16.msra.mxu0 %v218
    %243 = vmatprep.subr.bf16.mxu0 0
    %244 = vmatpush1.bf16.msra.mxu0 0
    %245 = vmatprep.subr.bf16.mxu0 0
    %246 = vmatpush1.bf16.msra.mxu0 0
    %247 = vmatprep.subr.bf16.mxu0 0
    %248 = vmatpush1.bf16.msra.mxu0 0
    %249 = vmatprep.subr.bf16.mxu0 0
    %250 = vmatpush1.bf16.msra.mxu0 0
    %251 = vmatprep.subr.bf16.mxu0 0
    %252 = vmatpush1.bf16.msra.mxu0 0
    %253 = vmatprep.subr.bf16.mxu0 0
    %254 = vmatpush1.bf16.msra.mxu0 0
    %255 = vmatprep.subr.bf16.mxu0 0
    %256 = vmatpush1.bf16.msra.mxu0 0
    %257 = vmatprep.subr.bf16.mxu0 0
    %258 = vmatpush1.bf16.msra.mxu0 0
    %259 = vmatprep.mubr.bf16.mxu0 0
    %260 = vmatmul.mubr.bf16.gmra.mrb[0].mxu0 %v155
    %v261 = vpop.f32.mrb[0].mxu0
    %v262 = vadd.f32 %v177, %v261
    %v263 = vpop.f32.mrb[0].mxu0
    %v264 = vpop.f32.mrb[0].mxu0
    %v265 = vadd.f32 %v177, %v264
    %v266 = vpop.f32.mrb[0].mxu0
    %267 = vdwg.mxu0
    %v268 = vmax.f32 %v262, 0.0
    %v269 = vmax.f32 %v265, 0.0
    %v270 = vpack.c.bf16 %v269, %v268
    %v271 = vld [vmem:[#allocation5] sm:$0xf]
    %v272 = vld [vmem:[#allocation5 + $0x4] sm:$0xf]
    %v273 = vld [vmem:[#allocation5 + $0x8] sm:$0xf]
    %v274 = vld [vmem:[#allocation5 + $0xc] sm:$0xf]
    %v275 = vld [vmem:[#allocation5 + $0x10] sm:$0xf]
    %v276 = vld [vmem:[#allocation5 + $0x14] sm:$0xf]
    %v277 = vld [vmem:[#allocation5 + $0x18] sm:$0xf]
    %v278 = vld [vmem:[#allocation5 + $0x1c] sm:$0xf]
    %v279 = vld [vmem:[#allocation5 + $0x20] sm:$0xf]
    %v280 = vld [vmem:[#allocation5 + $0x24] sm:$0xf]
    %v281 = vld [vmem:[#allocation5 + $0x28] sm:$0xf]
    %v282 = vld [vmem:[#allocation5 + $0x2c] sm:$0xf]
    %v283 = vld [vmem:[#allocation5 + $0x30] sm:$0xf]
    %v284 = vld [vmem:[#allocation5 + $0x34] sm:$0xf]
    %v285 = vld [vmem:[#allocation5 + $0x38] sm:$0xf]
    %v286 = vld [vmem:[#allocation5 + $0x3c] sm:$0xf]
    %v287 = vld [vmem:[%s6] sm:$0x1]
    %v289 = vlaneseq
    %v290 = vshrl.u32 %v289, 7
    %v291 = vsub.s32 0, %v290
    %v292 = vrot.slane %v287, %v291
    %v310 = vunpack.c.l.b16 %v271
    %v311 = vunpack.c.l.b16 %v272
    %v312 = vunpack.c.l.b16 %v273
    %v313 = vunpack.c.l.b16 %v274
    %v314 = vunpack.c.l.b16 %v275
    %v315 = vunpack.c.l.b16 %v276
    %v316 = vunpack.c.l.b16 %v277
    %v317 = vunpack.c.l.b16 %v278
    %v318 = vunpack.c.l.b16 %v279
    %v319 = vunpack.c.l.b16 %v280
    %v320 = vunpack.c.l.b16 %v281
    %v321 = vunpack.c.l.b16 %v282
    %v322 = vunpack.c.l.b16 %v283
    %v323 = vunpack.c.l.b16 %v284
    %v324 = vunpack.c.l.b16 %v285
    %v325 = vunpack.c.l.b16 %v286
    %v326 = vpack.c.b16 %v311, %v310
    %v327 = vpack.c.b16 %v313, %v312
    %v328 = vpack.c.b16 %v315, %v314
    %v329 = vpack.c.b16 %v317, %v316
    %v330 = vpack.c.b16 %v319, %v318
    %v331 = vpack.c.b16 %v321, %v320
    %v332 = vpack.c.b16 %v323, %v322
    %v333 = vpack.c.b16 %v325, %v324
    %342 = vmatprep.subr.bf16.mxu0 0
    %343 = vmatpush1.bf16.msra.mxu0 %v326
    %344 = vmatprep.subr.bf16.mxu0 0
    %345 = vmatpush1.bf16.msra.mxu0 %v327
    %346 = vmatprep.subr.bf16.mxu0 0
    %347 = vmatpush1.bf16.msra.mxu0 %v328
    %348 = vmatprep.subr.bf16.mxu0 0
    %349 = vmatpush1.bf16.msra.mxu0 %v329
    %350 = vmatprep.subr.bf16.mxu0 0
    %351 = vmatpush1.bf16.msra.mxu0 %v330
    %352 = vmatprep.subr.bf16.mxu0 0
    %353 = vmatpush1.bf16.msra.mxu0 %v331
    %354 = vmatprep.subr.bf16.mxu0 0
    %355 = vmatpush1.bf16.msra.mxu0 %v332
    %356 = vmatprep.subr.bf16.mxu0 0
    %357 = vmatpush1.bf16.msra.mxu0 %v333
    %358 = vmatprep.subr.bf16.mxu0 0
    %359 = vmatpush1.bf16.msra.mxu0 0
    %360 = vmatprep.subr.bf16.mxu0 0
    %361 = vmatpush1.bf16.msra.mxu0 0
    %362 = vmatprep.subr.bf16.mxu0 0
    %363 = vmatpush1.bf16.msra.mxu0 0
    %364 = vmatprep.subr.bf16.mxu0 0
    %365 = vmatpush1.bf16.msra.mxu0 0
    %366 = vmatprep.subr.bf16.mxu0 0
    %367 = vmatpush1.bf16.msra.mxu0 0
    %368 = vmatprep.subr.bf16.mxu0 0
    %369 = vmatpush1.bf16.msra.mxu0 0
    %370 = vmatprep.subr.bf16.mxu0 0
    %371 = vmatpush1.bf16.msra.mxu0 0
    %372 = vmatprep.subr.bf16.mxu0 0
    %373 = vmatpush1.bf16.msra.mxu0 0
    %374 = vmatprep.mubr.bf16.mxu0 0
    %375 = vmatmul.mubr.bf16.gmra.mrb[0].mxu0 %v270
    %v376 = vpop.f32.mrb[0].mxu0
    %v377 = vadd.f32 %v292, %v376
    %v378 = vpop.f32.mrb[0].mxu0
    %v379 = vpop.f32.mrb[0].mxu0
    %v380 = vadd.f32 %v292, %v379
    %v381 = vpop.f32.mrb[0].mxu0
    %382 = vdwg.mxu0
    %v383 = vmax.f32 %v377, 0.0
    %v384 = vmax.f32 %v380, 0.0
    %vm385 = vcmp.eq.s32.totalorder %v61, 0
    %vm386 = vcmp.eq.s32.totalorder %v62, 0
    %v387 = vsel %vm385, 1, 0
    %v388 = vsel %vm386, 1, 0
    %389 = vset.pattern.permute.xlu0 7
    %390 = vperm.xlu0 %389, %v387
    %v391 = vpop.permute.xlu0 %390
    %392 = vset.pattern.permute.xlu0 7
    %393 = vperm.xlu0 %392, %v388
    %v394 = vpop.permute.xlu0 %393
    %vm395 = vcmp.eq.s32.totalorder %v391, 1
    %vm396 = vcmp.eq.s32.totalorder %v394, 1
    %v397 = vsel %vm395, %v383, 0.0
    %v398 = vsel %vm396, %v384, 0.0
    %v399 = vmax.f32 %v397, %v398
    %v400 = vrot.slane %v399, 4
    %v401 = vmax.f32 %v399, %v400
    %v402 = vrot.slane %v401, 2
    %v403 = vmax.f32 %v401, %v402
    %v404 = vrot.slane %v403, 1
    %v405 = vmax.f32 %v403, %v404
    %vm406 = vcmp.eq.s32.totalorder %v61, 1
    %vm407 = vcmp.eq.s32.totalorder %v62, 1
    %v408 = vsel %vm406, 1, 0
    %v409 = vsel %vm407, 1, 0
    %410 = vset.pattern.permute.xlu0 7
    %411 = vperm.xlu0 %410, %v408
    %v412 = vpop.permute.xlu0 %411
    %413 = vset.pattern.permute.xlu0 7
    %414 = vperm.xlu0 %413, %v409
    %v415 = vpop.permute.xlu0 %414
    %vm416 = vcmp.eq.s32.totalorder %v412, 1
    %vm417 = vcmp.eq.s32.totalorder %v415, 1
    %v418 = vsel %vm416, %v383, 0.0
    %v419 = vsel %vm417, %v384, 0.0
    %v420 = vmax.f32 %v418, %v419
    %v421 = vrot.slane %v420, 4
    %v422 = vmax.f32 %v420, %v421
    %v423 = vrot.slane %v422, 2
    %v424 = vmax.f32 %v422, %v423
    %v425 = vrot.slane %v424, 1
    %v426 = vmax.f32 %v424, %v425
    %vm427 = vcmask 1040384
    %v428 = vsel %vm427, %v405, %v426
    %vm429 = vcmask 1041408
    %v430 = vsel %vm429, %v428, 0.0
    %v431 = vld [vmem:[#allocation7] sm:$0xff]
    %v432 = vmax.f32 %v431, %v430
    %433 = vst [vmem:[#allocation7] sm:$0xff] %v432
    // Predicated region
    $region42: #{tpu_custom_call.1} parent=1 // pred_check
      _
    $region43: #{tpu_custom_call.1} parent=1 // pred_check_branch
      %435 = sbr.rel (0) target = $region45
    $region44: #{tpu_custom_call.1} parent=1 // pred_region
      %s437 = ssub.s32 128, 128
      %438 = vsyncadd [#allocation4], %s437
      %s440 = sshll.u32 [#allocation7], 4
      %s441 = int_to_ptr.vmem [resolvable:$true] %s440
      %443 = dma.vmem_to_hbm [thread:$0]  %s441, 128, %s7, [#allocation4]
    $region45: #{tpu_custom_call.1} parent=1 // pred_fallthru
      _
    // Predicated region
    $region46: #{tpu_custom_call.1} parent=1 // pred_check
      _
    $region47: #{tpu_custom_call.1} parent=1 // pred_check_branch
      %445 = sbr.rel (0) target = $region49
    $region48: #{tpu_custom_call.1} parent=1 // pred_region
      %446 = dma.done [#allocation4], 128
    $region49: #{tpu_custom_call.1} parent=1 // pred_fallthru
      _
    %447 = vsyncpa [#allocation3], 1
    %448 = vsyncpa [#allocation6], 1
    %449 = vsyncpa [#allocation4], 1

</llo_original>
